<compile_context>
chip_gen: v6e
topology: v6e:2x2x1
jax: 0.10.0
libtpu: 0.0.40
codegen_flags: <defaults>
</compile_context>

<pallas_src>
import functools

import jax
import jax.numpy as jnp
from jax import lax
from jax.experimental import pallas as pl
from jax.experimental.pallas import tpu as pltpu

# Small compat shim for older jax releases that still expose TPUCompilerParams.
_CompilerParams = getattr(pltpu, "CompilerParams", None)
if _CompilerParams is None:  # pragma: no cover
    _CompilerParams = pltpu.TPUCompilerParams

_VMEM_LIMIT = 32 * 1024 * 1024  # explicit; safe on v5e/v6e (128 MiB) and v7x (64 MiB)


def _flash_kernel(q_ref, k_ref, v_ref, o_ref, m_sc, l_sc, acc_sc, *, tq, tk):
    """One (batch, head, q-block, k-block) step of causal flash attention."""
    qi = pl.program_id(2)
    ki = pl.program_id(3)

    @pl.when(ki == 0)
    def _():
        m_sc[...] = jnp.full_like(m_sc, -jnp.inf)
        l_sc[...] = jnp.zeros_like(l_sc)
        acc_sc[...] = jnp.zeros_like(acc_sc)

    # Skip key blocks that lie entirely above the causal diagonal.
    @pl.when(ki * tk <= qi * tq + (tq - 1))
    def _():
        q = q_ref[0, 0]  # (TQ, Dh) bf16; 1/sqrt(C) already folded into Wq
        k = k_ref[0, 0]  # (TK, Dh) bf16
        v = v_ref[0, 0]  # (TK, Dh) bf16

        # q @ k^T without an explicit transpose: contract head_dim with head_dim.
        s = lax.dot_general(q, k, (((1,), (1,)), ((), ())),
                            preferred_element_type=jnp.float32)  # (TQ, TK) f32

        # Causal mask regenerated in-kernel (no O(T^2) bias streamed from HBM).
        row = lax.broadcasted_iota(jnp.int32, (tq, tk), 0) + qi * tq
        col = lax.broadcasted_iota(jnp.int32, (tq, tk), 1) + ki * tk
        s = jnp.where(row >= col, s, -1e30)

        m_prev = m_sc[...]
        m_new = jnp.maximum(m_prev, jnp.max(s, axis=-1, keepdims=True))
        alpha = jnp.exp(m_prev - m_new)
        p = jnp.exp(s - m_new)
        l_sc[...] = alpha * l_sc[...] + jnp.sum(p, axis=-1, keepdims=True)
        acc_sc[...] = alpha * acc_sc[...] + jnp.dot(
            p.astype(jnp.bfloat16), v, preferred_element_type=jnp.float32)
        m_sc[...] = m_new
        # attention dropout: identity in eval mode

    @pl.when(ki == pl.num_programs(3) - 1)
    def _():
        inv = pl.reciprocal(l_sc[...], approx=True)
        o_ref[0, 0] = (acc_sc[...] * inv).astype(o_ref.dtype)


def _proj_kernel(a_ref, w_ref, b_ref, o_ref):
    """Output projection: (TP, C) @ (C, C) + bias, lane-dense, bf16 MXU/f32 acc."""
    out = jnp.dot(a_ref[0], w_ref[...],
                  preferred_element_type=jnp.float32) + b_ref[...]
    # output dropout: identity in eval mode
    o_ref[0] = out.astype(o_ref.dtype)


def multi_head_attention(x, wq, wk, wv, wp, bp, *, num_heads, head_dim,
                         q_block=128, k_block=128):
    """x: (B, T, C) f32; wq/wk/wv: (H, Dh, C); wp: (C, C); bp: (C,).

    Eval-mode forward of the PyTorch MultiHeadAttention. Returns (B, T, C).
    """
    B, T, C = x.shape
    H, Dh = num_heads, head_dim
    assert H * Dh == C

    TQ = min(q_block, T)
    TK = min(k_block, T)
    assert T % TQ == 0 and T % TK == 0
    NQ, NK = T // TQ, T // TK

    scale = 1.0 / (C ** 0.5)  # PyTorch module scales by C ** 0.5 (emb_dim)

    # ---- Host-side (plain XLA) weight packing and fused QKV projection ------
    # PyTorch Linear computes x @ W[h].T; fuse heads and pre-transpose so the
    # projection is a single lane-dense GEMM.  Fold the 1/sqrt(C) scale into Wq.
    wq_t = (wq.reshape(H * Dh, C).T * scale).astype(jnp.bfloat16)  # (C, C)
    wk_t = wk.reshape(H * Dh, C).T.astype(jnp.bfloat16)            # (C, C)
    wv_t = wv.reshape(H * Dh, C).T.astype(jnp.bfloat16)            # (C, C)
    wqkv_t = jnp.concatenate([wq_t, wk_t, wv_t], axis=1)           # (C, 3C)
    wp_t = wp.T.astype(jnp.bfloat16)                                # (C, C)
    bp2 = bp.reshape(1, C).astype(jnp.float32)

    x_bf = x.astype(jnp.bfloat16)
    qkv = jnp.dot(x_bf, wqkv_t, preferred_element_type=jnp.float32)  # (B, T, 3C)
    qkv = qkv.astype(jnp.bfloat16)
    qkv = qkv.reshape(B, T, 3, H, Dh).transpose(2, 0, 3, 1, 4)       # (3, B, H, T, Dh)
    q, k, v = qkv[0], qkv[1], qkv[2]

    # ---- Flash attention (Pallas): grid (B, H, q-block, k-block) ------------
    attn = pl.pallas_call(
        functools.partial(_flash_kernel, tq=TQ, tk=TK),
        out_shape=jax.ShapeDtypeStruct((B, H, T, Dh), jnp.bfloat16),
        grid_spec=pltpu.PrefetchScalarGridSpec(
            num_scalar_prefetch=0,
            grid=(B, H, NQ, NK),
            in_specs=[
                pl.BlockSpec((1, 1, TQ, Dh), lambda b, h, qi, ki: (b, h, qi, 0)),
                pl.BlockSpec((1, 1, TK, Dh), lambda b, h, qi, ki: (b, h, ki, 0)),
                pl.BlockSpec((1, 1, TK, Dh), lambda b, h, qi, ki: (b, h, ki, 0)),
            ],
            out_specs=pl.BlockSpec((1, 1, TQ, Dh),
                                   lambda b, h, qi, ki: (b, h, qi, 0)),
            scratch_shapes=[
                pltpu.VMEM((TQ, 1), jnp.float32),    # running max m
                pltpu.VMEM((TQ, 1), jnp.float32),    # running denom l
                pltpu.VMEM((TQ, Dh), jnp.float32),   # running output acc
            ],
        ),
        compiler_params=_CompilerParams(
            dimension_semantics=("parallel", "parallel", "parallel", "arbitrary"),
            vmem_limit_bytes=_VMEM_LIMIT),
    )(q, k, v)

    # Concatenate heads on the lane axis (matches torch.cat(dim=-1) ordering).
    cat = attn.transpose(0, 2, 1, 3).reshape(B, T, C)  # (B, T, C) bf16

    # ---- Output projection + bias (Pallas) -----------------------------------
    TP = TQ
    out = pl.pallas_call(
        _proj_kernel,
        out_shape=jax.ShapeDtypeStruct((B, T, C), x.dtype),
        grid_spec=pltpu.PrefetchScalarGridSpec(
            num_scalar_prefetch=0,
            grid=(B, T // TP),
            in_specs=[
                pl.BlockSpec((1, TP, C), lambda b, t: (b, t, 0)),  # attn output
                pl.BlockSpec((C, C), lambda b, t: (0, 0)),         # Wp_t
                pl.BlockSpec((1, C), lambda b, t: (0, 0)),         # bias
            ],
            out_specs=pl.BlockSpec((1, TP, C), lambda b, t: (b, t, 0)),
        ),
        compiler_params=_CompilerParams(
            dimension_semantics=("parallel", "parallel"),
            vmem_limit_bytes=_VMEM_LIMIT),
    )(cat, wp_t, bp2)
    return out


def _reference(x, wq, wk, wv, wp, bp, *, num_heads, head_dim):
    """Pure-JAX f32 reference mirroring the PyTorch forward (eval mode)."""
    B, T, C = x.shape
    scale = 1.0 / (C ** 0.5)
    tril = jnp.tril(jnp.ones((T, T), dtype=bool))
    outs = []
    for h in range(num_heads):
        q = x @ wq[h].T
        k = x @ wk[h].T
        v = x @ wv[h].T
        s = (q @ jnp.swapaxes(k, 1, 2)) * scale
        s = jnp.where(tril[None], s, -jnp.inf)
        p = jax.nn.softmax(s, axis=-1)
        outs.append(p @ v)
    cat = jnp.concatenate(outs, axis=-1)
    return cat @ wp.T + bp


if __name__ == "__main__":
    # Small shapes consistent with the module: num_heads*head_dim == emb_dim.
    B, T = 2, 8
    num_heads, head_dim = 4, 8
    emb_dim = num_heads * head_dim      # 32

    key = jax.random.PRNGKey(0)
    kx, kq, kk, kv, kp, kb = jax.random.split(key, 6)

    x = jax.random.normal(kx, (B, T, emb_dim), dtype=jnp.float32)
    wq = jax.random.normal(kq, (num_heads, head_dim, emb_dim), jnp.float32) * 0.1
    wk = jax.random.normal(kk, (num_heads, head_dim, emb_dim), jnp.float32) * 0.1
    wv = jax.random.normal(kv, (num_heads, head_dim, emb_dim), jnp.float32) * 0.1
    wp = jax.random.normal(kp, (emb_dim, emb_dim), jnp.float32) * 0.1
    bp = jax.random.normal(kb, (emb_dim,), jnp.float32) * 0.1

    out = multi_head_attention(x, wq, wk, wv, wp, bp,
                               num_heads=num_heads, head_dim=head_dim)
    out = jax.block_until_ready(out)

    ref = _reference(x, wq, wk, wv, wp, bp,
                     num_heads=num_heads, head_dim=head_dim)
    assert out.shape == (B, T, emb_dim)
    # bf16 matmuls with f32 accumulation vs f32 reference -> relaxed tolerance.
    assert jnp.allclose(out, ref, atol=3e-2, rtol=3e-2), "mismatch vs reference"

    print("KERNEL_OK")
</pallas_src>

<mosaic_0001>
module attributes {stable_mosaic.version = 11 : i64} {
  func.func @_flash_kernel(%arg0: i32, %arg1: i32, %arg2: i32, %arg3: i32, %arg4: memref<1x1x8x8xbf16, #tpu.memory_space<vmem>>, %arg5: memref<1x1x8x8xbf16, #tpu.memory_space<vmem>>, %arg6: memref<1x1x8x8xbf16, #tpu.memory_space<vmem>>, %arg7: memref<1x1x8x8xbf16, #tpu.memory_space<vmem>>, %arg8: memref<8x1xf32, #tpu.memory_space<vmem>>, %arg9: memref<8x1xf32, #tpu.memory_space<vmem>>, %arg10: memref<8x8xf32, #tpu.memory_space<vmem>>) attributes {dimension_semantics = [#tpu.dimension_semantics<parallel>, #tpu.dimension_semantics<parallel>, #tpu.dimension_semantics<parallel>, #tpu.dimension_semantics<arbitrary>], iteration_bounds = array<i64: 2, 4, 1, 1>, scalar_prefetch = 0 : i64, scratch_operands = 3 : i64, tpu.core_type = #tpu.core_type<tc>, window_params = [{transform_indices = @transform_0, window_bounds = array<i64: 1, 1, 8, 8>}, {transform_indices = @transform_1, window_bounds = array<i64: 1, 1, 8, 8>}, {transform_indices = @transform_2, window_bounds = array<i64: 1, 1, 8, 8>}, {transform_indices = @transform_3, window_bounds = array<i64: 1, 1, 8, 8>}]} {
    %c0_i32 = arith.constant 0 : i32
    %0 = arith.cmpi eq, %arg3, %c0_i32 : i32
    %1 = arith.extui %0 : i1 to i32
    %c0_i32_0 = arith.constant 0 : i32
    %2 = arith.cmpi ne, %1, %c0_i32_0 : i32
    scf.if %2 {
      %cst = arith.constant 0xFF800000 : f32
      %12 = vector.broadcast %cst : f32 to vector<8x1xf32>
      %c0 = arith.constant 0 : index
      %c0_5 = arith.constant 0 : index
      %13 = vector.load %arg8[%c0, %c0_5] : memref<8x1xf32, #tpu.memory_space<vmem>>, vector<8x1xf32>
      tpu.vector_store %arg8[%c0, %c0_5], %12 {strides = array<i32>} : memref<8x1xf32, #tpu.memory_space<vmem>>, vector<8x1xf32>,
      %cst_6 = arith.constant 0.000000e+00 : f32
      %14 = vector.broadcast %cst_6 : f32 to vector<8x1xf32>
      %c0_7 = arith.constant 0 : index
      %c0_8 = arith.constant 0 : index
      %15 = vector.load %arg9[%c0_7, %c0_8] : memref<8x1xf32, #tpu.memory_space<vmem>>, vector<8x1xf32>
      tpu.vector_store %arg9[%c0_7, %c0_8], %14 {strides = array<i32>} : memref<8x1xf32, #tpu.memory_space<vmem>>, vector<8x1xf32>,
      %cst_9 = arith.constant 0.000000e+00 : f32
      %16 = vector.broadcast %cst_9 : f32 to vector<8x8xf32>
      %c0_10 = arith.constant 0 : index
      %c0_11 = arith.constant 0 : index
      %17 = vector.load %arg10[%c0_10, %c0_11] : memref<8x8xf32, #tpu.memory_space<vmem>>, vector<8x8xf32>
      tpu.vector_store %arg10[%c0_10, %c0_11], %16 {strides = array<i32>} : memref<8x8xf32, #tpu.memory_space<vmem>>, vector<8x8xf32>,
    } else {
    }
    %c8_i32 = arith.constant 8 : i32
    %3 = arith.muli %arg3, %c8_i32 : i32
    %c8_i32_1 = arith.constant 8 : i32
    %4 = arith.muli %arg2, %c8_i32_1 : i32
    %c7_i32 = arith.constant 7 : i32
    %5 = arith.addi %4, %c7_i32 : i32
    %6 = arith.cmpi sle, %3, %5 : i32
    %7 = arith.extui %6 : i1 to i32
    %c0_i32_2 = arith.constant 0 : i32
    %8 = arith.cmpi ne, %7, %c0_i32_2 : i32
    scf.if %8 {
      %c0 = arith.constant 0 : index
      %c0_5 = arith.constant 0 : index
      %c0_6 = arith.constant 0 : index
      %c0_7 = arith.constant 0 : index
      %12 = vector.load %arg4[%c0, %c0_5, %c0_6, %c0_7] : memref<1x1x8x8xbf16, #tpu.memory_space<vmem>>, vector<1x1x8x8xbf16>
      %13 = vector.shape_cast %12 : vector<1x1x8x8xbf16> to vector<8x8xbf16>
      %c0_8 = arith.constant 0 : index
      %c0_9 = arith.constant 0 : index
      %c0_10 = arith.constant 0 : index
      %c0_11 = arith.constant 0 : index
      %14 = vector.load %arg5[%c0_8, %c0_9, %c0_10, %c0_11] : memref<1x1x8x8xbf16, #tpu.memory_space<vmem>>, vector<1x1x8x8xbf16>
      %15 = vector.shape_cast %14 : vector<1x1x8x8xbf16> to vector<8x8xbf16>
      %c0_12 = arith.constant 0 : index
      %c0_13 = arith.constant 0 : index
      %c0_14 = arith.constant 0 : index
      %c0_15 = arith.constant 0 : index
      %16 = vector.load %arg6[%c0_12, %c0_13, %c0_14, %c0_15] : memref<1x1x8x8xbf16, #tpu.memory_space<vmem>>, vector<1x1x8x8xbf16>
      %17 = vector.shape_cast %16 : vector<1x1x8x8xbf16> to vector<8x8xbf16>
      %cst = arith.constant dense<0.000000e+00> : vector<8x8xf32>
      %18 = tpu.matmul %13, %15, %cst {dimension_numbers = #tpu.dot_dimension_numbers<[1], [1], [0], [0], [0, 0, 1, 0], [], []>} : vector<8x8xbf16>, vector<8x8xbf16>, vector<8x8xf32> -> vector<8x8xf32>
      %19 = tpu.iota {dimensions = array<i32: 0>} : vector<8x8xi32>
      %c8_i32_16 = arith.constant 8 : i32
      %20 = arith.muli %arg2, %c8_i32_16 : i32
      %21 = vector.broadcast %20 : i32 to vector<8x8xi32>
      %22 = arith.addi %19, %21 : vector<8x8xi32>
      %23 = tpu.iota {dimensions = array<i32: 1>} : vector<8x8xi32>
      %c8_i32_17 = arith.constant 8 : i32
      %24 = arith.muli %arg3, %c8_i32_17 : i32
      %25 = vector.broadcast %24 : i32 to vector<8x8xi32>
      %26 = arith.addi %23, %25 : vector<8x8xi32>
      %27 = arith.cmpi sge, %22, %26 : vector<8x8xi32>
      %cst_18 = arith.constant -1.000000e+30 : f32
      %28 = vector.broadcast %cst_18 : f32 to vector<8x8xf32>
      %29 = arith.select %27, %18, %28 : vector<8x8xi1>, vector<8x8xf32>
      %c0_19 = arith.constant 0 : index
      %c0_20 = arith.constant 0 : index
      %30 = vector.load %arg8[%c0_19, %c0_20] : memref<8x1xf32, #tpu.memory_space<vmem>>, vector<8x1xf32>
      %cst_21 = arith.constant dense<0xFF800000> : vector<8xf32>
      %31 = vector.multi_reduction <maximumf>, %29, %cst_21 [1] : vector<8x8xf32> to vector<8xf32>
      %32 = vector.shape_cast %31 : vector<8xf32> to vector<8x1xf32>
      %33 = arith.maximumf %30, %32 : vector<8x1xf32>
      %34 = arith.subf %30, %33 : vector<8x1xf32>
      %35 = math.exp %34 : vector<8x1xf32>
      %36 = vector.broadcast %33 : vector<8x1xf32> to vector<8x8xf32>
      %37 = arith.subf %29, %36 : vector<8x8xf32>
      %38 = math.exp %37 : vector<8x8xf32>
      %c0_22 = arith.constant 0 : index
      %c0_23 = arith.constant 0 : index
      %39 = vector.load %arg9[%c0_22, %c0_23] : memref<8x1xf32, #tpu.memory_space<vmem>>, vector<8x1xf32>
      %40 = arith.mulf %35, %39 : vector<8x1xf32>
      %cst_24 = arith.constant dense<0.000000e+00> : vector<8xf32>
      %41 = vector.multi_reduction <add>, %38, %cst_24 [1] : vector<8x8xf32> to vector<8xf32>
      %42 = vector.shape_cast %41 : vector<8xf32> to vector<8x1xf32>
      %43 = arith.addf %40, %42 : vector<8x1xf32>
      %c0_25 = arith.constant 0 : index
      %c0_26 = arith.constant 0 : index
      %44 = vector.load %arg9[%c0_25, %c0_26] : memref<8x1xf32, #tpu.memory_space<vmem>>, vector<8x1xf32>
      tpu.vector_store %arg9[%c0_25, %c0_26], %43 {strides = array<i32>} : memref<8x1xf32, #tpu.memory_space<vmem>>, vector<8x1xf32>,
      %c0_27 = arith.constant 0 : index
      %c0_28 = arith.constant 0 : index
      %45 = vector.load %arg10[%c0_27, %c0_28] : memref<8x8xf32, #tpu.memory_space<vmem>>, vector<8x8xf32>
      %46 = vector.broadcast %35 : vector<8x1xf32> to vector<8x8xf32>
      %47 = arith.mulf %46, %45 : vector<8x8xf32>
      %48 = arith.truncf %38 : vector<8x8xf32> to vector<8x8xbf16>
      %cst_29 = arith.constant dense<0.000000e+00> : vector<8x8xf32>
      %49 = tpu.matmul %48, %17, %cst_29 {dimension_numbers = #tpu.dot_dimension_numbers<[1], [0], [0], [1], [0, 0, 1, 1], [], []>} : vector<8x8xbf16>, vector<8x8xbf16>, vector<8x8xf32> -> vector<8x8xf32>
      %50 = arith.addf %47, %49 : vector<8x8xf32>
      %c0_30 = arith.constant 0 : index
      %c0_31 = arith.constant 0 : index
      %51 = vector.load %arg10[%c0_30, %c0_31] : memref<8x8xf32, #tpu.memory_space<vmem>>, vector<8x8xf32>
      tpu.vector_store %arg10[%c0_30, %c0_31], %50 {strides = array<i32>} : memref<8x8xf32, #tpu.memory_space<vmem>>, vector<8x8xf32>,
      %c0_32 = arith.constant 0 : index
      %c0_33 = arith.constant 0 : index
      %52 = vector.load %arg8[%c0_32, %c0_33] : memref<8x1xf32, #tpu.memory_space<vmem>>, vector<8x1xf32>
      tpu.vector_store %arg8[%c0_32, %c0_33], %33 {strides = array<i32>} : memref<8x1xf32, #tpu.memory_space<vmem>>, vector<8x1xf32>,
    } else {
    }
    %c0_i32_3 = arith.constant 0 : i32
    %9 = arith.cmpi eq, %arg3, %c0_i32_3 : i32
    %10 = arith.extui %9 : i1 to i32
    %c0_i32_4 = arith.constant 0 : i32
    %11 = arith.cmpi ne, %10, %c0_i32_4 : i32
    scf.if %11 {
      %c0 = arith.constant 0 : index
      %c0_5 = arith.constant 0 : index
      %12 = vector.load %arg9[%c0, %c0_5] : memref<8x1xf32, #tpu.memory_space<vmem>>, vector<8x1xf32>
      %13 = tpu.reciprocal %12 {approx = true} : vector<8x1xf32> -> vector<8x1xf32>
      %c0_6 = arith.constant 0 : index
      %c0_7 = arith.constant 0 : index
      %14 = vector.load %arg10[%c0_6, %c0_7] : memref<8x8xf32, #tpu.memory_space<vmem>>, vector<8x8xf32>
      %15 = vector.broadcast %13 : vector<8x1xf32> to vector<8x8xf32>
      %16 = arith.mulf %14, %15 : vector<8x8xf32>
      %17 = arith.truncf %16 : vector<8x8xf32> to vector<8x8xbf16>
      %c0_8 = arith.constant 0 : index
      %c0_9 = arith.constant 0 : index
      %c0_10 = arith.constant 0 : index
      %c0_11 = arith.constant 0 : index
      %18 = vector.load %arg7[%c0_8, %c0_9, %c0_10, %c0_11] : memref<1x1x8x8xbf16, #tpu.memory_space<vmem>>, vector<1x1x8x8xbf16>
      %19 = vector.shape_cast %18 : vector<1x1x8x8xbf16> to vector<8x8xbf16>
      %20 = vector.shape_cast %17 : vector<8x8xbf16> to vector<1x1x8x8xbf16>
      tpu.vector_store %arg7[%c0_8, %c0_9, %c0_10, %c0_11], %20 {strides = array<i32>} : memref<1x1x8x8xbf16, #tpu.memory_space<vmem>>, vector<1x1x8x8xbf16>,
    } else {
    }
    return
  }
  func.func @transform_0(%arg0: i32, %arg1: i32, %arg2: i32, %arg3: i32) -> (i32, i32, i32, i32) {
    %c0_i32 = arith.constant 0 : i32
    %c0_i32_0 = arith.constant 0 : i32
    return %arg0, %arg1, %arg2, %c0_i32 : i32, i32, i32, i32
  }
  func.func @transform_1(%arg0: i32, %arg1: i32, %arg2: i32, %arg3: i32) -> (i32, i32, i32, i32) {
    %c0_i32 = arith.constant 0 : i32
    %c0_i32_0 = arith.constant 0 : i32
    return %arg0, %arg1, %arg3, %c0_i32 : i32, i32, i32, i32
  }
  func.func @transform_2(%arg0: i32, %arg1: i32, %arg2: i32, %arg3: i32) -> (i32, i32, i32, i32) {
    %c0_i32 = arith.constant 0 : i32
    %c0_i32_0 = arith.constant 0 : i32
    return %arg0, %arg1, %arg3, %c0_i32 : i32, i32, i32, i32
  }
  func.func @transform_3(%arg0: i32, %arg1: i32, %arg2: i32, %arg3: i32) -> (i32, i32, i32, i32) {
    %c0_i32 = arith.constant 0 : i32
    %c0_i32_0 = arith.constant 0 : i32
    return %arg0, %arg1, %arg2, %c0_i32 : i32, i32, i32, i32
  }
}

</mosaic_0001>

<llo_original>
// kernel: tpu_custom_call.1
$region0: #{tpu_custom_call.1}
  #allocation0 [shape = 'u32[]', space=smem, size = 0x4, offset = 0x4, fixed_abs, tag = 'smem constant byte address 0x4 - core index']
  #allocation1 [shape = 'u32[144,128]{1,0:T(1,128)}', space=vmem, size = 0x12000, scoped, tag = 'internal scratch']
  #allocation2 [shape = 'f32[8,1]{1,0:T(8,128)}', space=vmem, size = 0x1000, scoped, tag = 'scratch operand']
  #allocation3 [shape = 'f32[8,1]{1,0:T(8,128)}', space=vmem, size = 0x1000, scoped, tag = 'scratch operand']
  #allocation4 [shape = 'f32[8,8]{1,0:T(8,128)}', space=vmem, size = 0x1000, scoped, tag = 'scratch operand']
  %s0 = inlined_call_operand.hbm [shape: bf16[2,4,8,8], index: 0, kind: input, shape index: {}]
  %s1 = inlined_call_operand.hbm [shape: bf16[2,4,8,8], index: 1, kind: input, shape index: {}]
  %s2 = inlined_call_operand.hbm [shape: bf16[2,4,8,8], index: 2, kind: input, shape index: {}]
  %s3 = inlined_call_operand.hbm [shape: bf16[2,4,8,8], index: 3, kind: output, shape index: {}]
  %s4 = sld [smem:[#allocation0]]
  $region69: #{tpu_custom_call.1} parent=0
    _
  %s6 = ssub.s32 1, %s4
  %s7 = scalar_select 0, %s6, %s4
  $region1: #{tpu_custom_call.1} parent=0
    #allocation5 [shape = 'u8[4096]{0}', space=vmem, size = 0x1000, scoped, tag = 'input window, operand 0']
    #allocation6 [shape = 's32[2]{0}', space=sflag, size = 0x8, scoped, tag = 'scoped memory for tpu_custom_call.1']
    #allocation7 [shape = 's32[2]{0}', space=sflag, size = 0x8, scoped, tag = 'scoped memory for tpu_custom_call.1']
    #allocation8 [shape = 'u8[4096]{0}', space=vmem, size = 0x1000, scoped, tag = 'input window, operand 1']
    #allocation9 [shape = 's32[2]{0}', space=sflag, size = 0x8, scoped, tag = 'scoped memory for tpu_custom_call.1']
    #allocation10 [shape = 'u8[4096]{0}', space=vmem, size = 0x1000, scoped, tag = 'input window, operand 2']
    #allocation11 [shape = 'u8[4096]{0}', space=vmem, size = 0x1000, scoped, tag = 'output window, operand 0']
    %8 = vsyncpa [#allocation6], 0
    %s9 = scalar_lea.sflag [#allocation6], 1
    %10 = vsyncpa %s9, 0
    %11 = vsyncpa [#allocation9], 0
    %s12 = scalar_lea.sflag [#allocation9], 1
    %13 = vsyncpa %s12, 0
    %14 = vsyncpa [#allocation7], 0
    %s15 = scalar_lea.sflag [#allocation7], 1
    %16 = vsyncpa %s15, 0
    loop: start=0, step=1, limit=10
    $region2: #{tpu_custom_call.1} parent=1 // loop_pre_header
      _
    $region3: #{tpu_custom_call.1} parent=1 // loop_header
      %s18 = sphi 0, %s22
      %p19 = scmp.ge.s32.totalorder %s18, 10
      %s25 = sphi 0, %s51
      %s26 = sphi 0, %s47
      %s27 = sphi 0, %s43
      %s28 = sphi 0, %s39
      %s29 = sphi 0, %s25
      %s30 = sphi 0, %s26
      %s31 = sphi 0, %s27
      %s32 = sphi 0, %s28
      %s33 = sphi 0, %s29
      %s34 = sphi 0, %s30
      %s35 = sphi 0, %s31
      %s36 = sphi 0, %s32
      %s58 = sphi 0, %s60
      %s61 = sphi 0, %s58
      %s62 = sphi 0, %s61
      %s78 = sphi 0, %s62
      %s88 = sphi 0, %s90
      %s91 = sphi 0, %s88
      %s92 = sphi 0, %s91
      %s108 = sphi 0, %s92
      %s118 = sphi 0, %s120
      %s121 = sphi 0, %s118
      %s122 = sphi 0, %s121
      %s138 = sphi 0, %s122
      %s148 = sphi 0, %s150
      %s151 = sphi 0, %s148
      %s152 = sphi 0, %s151
      %s168 = sphi 0, %s152
    $region4: #{tpu_custom_call.1} parent=1 // loop_header_branch
      %21 = sbr.rel (%p19) target = $region8
    $region5: #{tpu_custom_call.1} parent=1 // loop_body
      %s23 = ssub.s32 %s18, 1
      %s24 = ssub.s32 %s18, 2
      %s37 = sadd.s32 1, %s28
      %p38 = scmp.ge.s32.totalorder %s37, 1
      %s39 = scalar_select %p38, 0, %s37
      %s40 = sadd.s32 1, %s27
      %s41 = scalar_select %p38, %s40, %s27
      %p42 = scmp.ge.s32.totalorder %s41, 1
      %s43 = scalar_select %p42, 0, %s41
      %s44 = sadd.s32 1, %s26
      %s45 = scalar_select %p42, %s44, %s26
      %p46 = scmp.ge.s32.totalorder %s45, 4
      %s47 = scalar_select %p46, 0, %s45
      %s48 = sadd.s32 1, %s25
      %s49 = scalar_select %p46, %s48, %s25
      %p50 = scmp.ge.s32.totalorder %s49, 2
      %s51 = scalar_select %p50, 0, %s49
      %s52 = ssub.s32 %s25, %s51
      %s53 = ssub.s32 %s26, %s47
      %s54 = sor.u32 %s52, %s53
      %s55 = ssub.s32 %s27, %s43
      %s56 = sor.u32 %s54, %s55
      %p57 = scmp.eq.s32.totalorder %s56, 0
      %s59 = sadd.s32 %s58, 1
      %s60 = scalar_select %p57, %s58, %s59
      %p63 = pneg %p57
      %p64 = scmp.eq.s32.totalorder %s18, 7
      %p65 = por %p63, %p64
      %p66 = scmp.ne.s32.totalorder %s58, %s61
      %p67 = scmp.eq.s32.totalorder %s18, 0
      %p68 = por %p66, %p67
      %p69 = scmp.ne.s32.totalorder %s58, %s61
      %p70 = scmp.eq.s32.totalorder %s23, 7
      %p71 = por %p69, %p70
      %p72 = scmp.ne.s32.totalorder %s61, %s62
      %p73 = scmp.eq.s32.totalorder %s23, 0
      %p74 = por %p72, %p73
      %p75 = scmp.ne.s32.totalorder %s61, %s62
      %p76 = scmp.eq.s32.totalorder %s24, 7
      %p77 = por %p75, %p76
      %p79 = scmp.ne.s32.totalorder %s62, %s78
      %p80 = scmp.eq.s32.totalorder %s24, 0
      %p81 = por %p79, %p80
      %s82 = ssub.s32 %s25, %s51
      %s83 = ssub.s32 %s26, %s47
      %s84 = sor.u32 %s82, %s83
      %s85 = ssub.s32 %s28, %s39
      %s86 = sor.u32 %s84, %s85
      %p87 = scmp.eq.s32.totalorder %s86, 0
      %s89 = sadd.s32 %s88, 1
      %s90 = scalar_select %p87, %s88, %s89
      %p93 = pneg %p87
      %p94 = scmp.eq.s32.totalorder %s18, 7
      %p95 = por %p93, %p94
      %p96 = scmp.ne.s32.totalorder %s88, %s91
      %p97 = scmp.eq.s32.totalorder %s18, 0
      %p98 = por %p96, %p97
      %p99 = scmp.ne.s32.totalorder %s88, %s91
      %p100 = scmp.eq.s32.totalorder %s23, 7
      %p101 = por %p99, %p100
      %p102 = scmp.ne.s32.totalorder %s91, %s92
      %p103 = scmp.eq.s32.totalorder %s23, 0
      %p104 = por %p102, %p103
      %p105 = scmp.ne.s32.totalorder %s91, %s92
      %p106 = scmp.eq.s32.totalorder %s24, 7
      %p107 = por %p105, %p106
      %p109 = scmp.ne.s32.totalorder %s92, %s108
      %p110 = scmp.eq.s32.totalorder %s24, 0
      %p111 = por %p109, %p110
      %s112 = ssub.s32 %s25, %s51
      %s113 = ssub.s32 %s26, %s47
      %s114 = sor.u32 %s112, %s113
      %s115 = ssub.s32 %s28, %s39
      %s116 = sor.u32 %s114, %s115
      %p117 = scmp.eq.s32.totalorder %s116, 0
      %s119 = sadd.s32 %s118, 1
      %s120 = scalar_select %p117, %s118, %s119
      %p123 = pneg %p117
      %p124 = scmp.eq.s32.totalorder %s18, 7
      %p125 = por %p123, %p124
      %p126 = scmp.ne.s32.totalorder %s118, %s121
      %p127 = scmp.eq.s32.totalorder %s18, 0
      %p128 = por %p126, %p127
      %p129 = scmp.ne.s32.totalorder %s118, %s121
      %p130 = scmp.eq.s32.totalorder %s23, 7
      %p131 = por %p129, %p130
      %p132 = scmp.ne.s32.totalorder %s121, %s122
      %p133 = scmp.eq.s32.totalorder %s23, 0
      %p134 = por %p132, %p133
      %p135 = scmp.ne.s32.totalorder %s121, %s122
      %p136 = scmp.eq.s32.totalorder %s24, 7
      %p137 = por %p135, %p136
      %p139 = scmp.ne.s32.totalorder %s122, %s138
      %p140 = scmp.eq.s32.totalorder %s24, 0
      %p141 = por %p139, %p140
      %s142 = ssub.s32 %s25, %s51
      %s143 = ssub.s32 %s26, %s47
      %s144 = sor.u32 %s142, %s143
      %s145 = ssub.s32 %s27, %s43
      %s146 = sor.u32 %s144, %s145
      %p147 = scmp.eq.s32.totalorder %s146, 0
      %s149 = sadd.s32 %s148, 1
      %s150 = scalar_select %p147, %s148, %s149
      %p153 = pneg %p147
      %p154 = scmp.eq.s32.totalorder %s18, 7
      %p155 = por %p153, %p154
      %p156 = scmp.ne.s32.totalorder %s148, %s151
      %p157 = scmp.eq.s32.totalorder %s18, 0
      %p158 = por %p156, %p157
      %p159 = scmp.ne.s32.totalorder %s148, %s151
      %p160 = scmp.eq.s32.totalorder %s23, 7
      %p161 = por %p159, %p160
      %p162 = scmp.ne.s32.totalorder %s151, %s152
      %p163 = scmp.eq.s32.totalorder %s23, 0
      %p164 = por %p162, %p163
      %p165 = scmp.ne.s32.totalorder %s151, %s152
      %p166 = scmp.eq.s32.totalorder %s24, 7
      %p167 = por %p165, %p166
      %p169 = scmp.ne.s32.totalorder %s152, %s168
      %p170 = scmp.eq.s32.totalorder %s24, 0
      %p171 = por %p169, %p170
      %p172 = scmp.le.s32.totalorder 1, %s18
      %p173 = scmp.lt.s32.totalorder %s18, 9
      %p174 = pnand %p172, %p173
      %p175 = pneg %p174
      // Predicated region
      $region9: #{tpu_custom_call.1} parent=5 // pred_check
        _
      $region10: #{tpu_custom_call.1} parent=5 // pred_check_branch
        %177 = sbr.rel (%p174) target = $region12
      $region11: #{tpu_custom_call.1} parent=5 // pred_region
        %s178 = ssub.s32 %s18, 1
      $region12: #{tpu_custom_call.1} parent=5 // pred_fallthru
        _
      %p179 = scmp.lt.s32.totalorder %s18, 8
      // Predicated region
      $region13: #{tpu_custom_call.1} parent=5 // pred_check
        %p180 = pneg %p179
      $region14: #{tpu_custom_call.1} parent=5 // pred_check_branch
        %182 = sbr.rel (%p180) target = $region16
      $region15: #{tpu_custom_call.1} parent=5 // pred_region
        // Predicated region
        $region17: #{tpu_custom_call.1} parent=15 // pred_check
          %p183 = pneg %p68
        $region18: #{tpu_custom_call.1} parent=15 // pred_check_branch
          %185 = sbr.rel (%p183) target = $region20
        $region19: #{tpu_custom_call.1} parent=15 // pred_region
          %s186 = sand.u32 %s58, 1
          %s187 = scalar_lea.sflag [#allocation6], %s186
          %s188 = sand.u32 %s58, 1
          %s189 = smul.addr %s188, 4
          %s190 = scalar_lea.vmem [#allocation5], %s189
          %s192 = ssub.s32 64, 64
          %193 = vsyncadd %s187, %s192
          %s194 = sadd.s32 %s27, %s26
          %s195 = smul.addr %s25, 4
          %s196 = sadd.s32 %s194, %s195
          %s197 = smul.addr %s196, 64
          %s198 = scalar_lea.hbm %s0, %s197
          %s200 = sshll.u32 %s190, 4
          %s201 = int_to_ptr.vmem [resolvable:$true] %s200
          %203 = dma.hbm_to_vmem [thread:$0]  %s198, 64, %s201, %s187
        $region20: #{tpu_custom_call.1} parent=15 // pred_fallthru
          _
        // Predicated region
        $region21: #{tpu_custom_call.1} parent=15 // pred_check
          %p204 = pneg %p98
        $region22: #{tpu_custom_call.1} parent=15 // pred_check_branch
          %206 = sbr.rel (%p204) target = $region24
        $region23: #{tpu_custom_call.1} parent=15 // pred_region
          %s207 = sand.u32 %s18, 1
          %s208 = scalar_lea.sflag [#allocation9], %s207
          %s209 = sand.u32 %s88, 1
          %s210 = smul.addr %s209, 4
          %s211 = scalar_lea.vmem [#allocation8], %s210
          %s213 = ssub.s32 64, 64
          %214 = vsyncadd %s208, %s213
          %s215 = sadd.s32 %s28, %s26
          %s216 = smul.addr %s25, 4
          %s217 = sadd.s32 %s215, %s216
          %s218 = smul.addr %s217, 64
          %s219 = scalar_lea.hbm %s1, %s218
          %s221 = sshll.u32 %s211, 4
          %s222 = int_to_ptr.vmem [resolvable:$true] %s221
          %224 = dma.hbm_to_vmem [thread:$0]  %s219, 64, %s222, %s208
        $region24: #{tpu_custom_call.1} parent=15 // pred_fallthru
          _
        // Predicated region
        $region25: #{tpu_custom_call.1} parent=15 // pred_check
          %p225 = pneg %p128
        $region26: #{tpu_custom_call.1} parent=15 // pred_check_branch
          %227 = sbr.rel (%p225) target = $region28
        $region27: #{tpu_custom_call.1} parent=15 // pred_region
          %s228 = sand.u32 %s18, 1
          %s229 = scalar_lea.sflag [#allocation9], %s228
          %s230 = sand.u32 %s118, 1
          %s231 = smul.addr %s230, 4
          %s232 = scalar_lea.vmem [#allocation10], %s231
          %s234 = ssub.s32 64, 64
          %235 = vsyncadd %s229, %s234
          %s236 = sadd.s32 %s28, %s26
          %s237 = smul.addr %s25, 4
          %s238 = sadd.s32 %s236, %s237
          %s239 = smul.addr %s238, 64
          %s240 = scalar_lea.hbm %s2, %s239
          %s242 = sshll.u32 %s232, 4
          %s243 = int_to_ptr.vmem [resolvable:$true] %s242
          %245 = dma.hbm_to_vmem [thread:$0]  %s240, 64, %s243, %s229
        $region28: #{tpu_custom_call.1} parent=15 // pred_fallthru
          _
      $region16: #{tpu_custom_call.1} parent=5 // pred_fallthru
        _
      %p246 = scmp.le.s32.totalorder 1, %s18
      %p247 = scmp.lt.s32.totalorder %s18, 9
      %p248 = pnand %p246, %p247
      %p249 = pneg %p248
      // Predicated region
      $region29: #{tpu_custom_call.1} parent=5 // pred_check
        _
      $region30: #{tpu_custom_call.1} parent=5 // pred_check_branch
        %251 = sbr.rel (%p248) target = $region32
      $region31: #{tpu_custom_call.1} parent=5 // pred_region
        %s252 = ssub.s32 %s18, 1
        %s253 = sand.u32 %s61, 1
        %s254 = scalar_lea.sflag [#allocation6], %s253
        %s255 = sand.u32 %s61, 1
        %s256 = smul.addr %s255, 4
        %s257 = scalar_lea.vmem [#allocation5], %s256
        // Predicated region
        $region33: #{tpu_custom_call.1} parent=31 // pred_check
          %p258 = pneg %p74
        $region34: #{tpu_custom_call.1} parent=31 // pred_check_branch
          %260 = sbr.rel (%p258) target = $region36
        $region35: #{tpu_custom_call.1} parent=31 // pred_region
          %261 = dma.done %s254, 64
        $region36: #{tpu_custom_call.1} parent=31 // pred_fallthru
          _
        %s262 = sand.u32 %s23, 1
        %s263 = scalar_lea.sflag [#allocation9], %s262
        %s264 = sand.u32 %s91, 1
        %s265 = smul.addr %s264, 4
        %s266 = scalar_lea.vmem [#allocation8], %s265
        // Predicated region
        $region37: #{tpu_custom_call.1} parent=31 // pred_check
          %p267 = pneg %p104
        $region38: #{tpu_custom_call.1} parent=31 // pred_check_branch
          %269 = sbr.rel (%p267) target = $region40
        $region39: #{tpu_custom_call.1} parent=31 // pred_region
          %270 = dma.done %s263, 64
        $region40: #{tpu_custom_call.1} parent=31 // pred_fallthru
          _
        %s271 = sand.u32 %s23, 1
        %s272 = scalar_lea.sflag [#allocation9], %s271
        %s273 = sand.u32 %s121, 1
        %s274 = smul.addr %s273, 4
        %s275 = scalar_lea.vmem [#allocation10], %s274
        // Predicated region
        $region41: #{tpu_custom_call.1} parent=31 // pred_check
          %p276 = pneg %p134
        $region42: #{tpu_custom_call.1} parent=31 // pred_check_branch
          %278 = sbr.rel (%p276) target = $region44
        $region43: #{tpu_custom_call.1} parent=31 // pred_region
          %279 = dma.done %s272, 64
        $region44: #{tpu_custom_call.1} parent=31 // pred_fallthru
          _
        %s280 = sand.u32 %s61, 1
        %s281 = scalar_lea.sflag [#allocation6], %s280
        %s282 = sand.u32 %s61, 1
        %s283 = smul.addr %s282, 4
        %s284 = scalar_lea.vmem [#allocation5], %s283
        %p285 = pneg %p74
        %p286 = pneg %p71
        %s287 = sand.u32 %s23, 1
        %s288 = scalar_lea.sflag [#allocation9], %s287
        %s289 = sand.u32 %s91, 1
        %s290 = smul.addr %s289, 4
        %s291 = scalar_lea.vmem [#allocation8], %s290
        %p292 = pneg %p104
        %p293 = pneg %p101
        %s294 = sand.u32 %s23, 1
        %s295 = scalar_lea.sflag [#allocation9], %s294
        %s296 = sand.u32 %s121, 1
        %s297 = smul.addr %s296, 4
        %s298 = scalar_lea.vmem [#allocation10], %s297
        %p299 = pneg %p134
        %p300 = pneg %p131
        %p301 = pneg %p164
        %p302 = pneg %p161
        %s303 = sand.u32 %s151, 1
        %s304 = scalar_lea.sflag [#allocation7], %s303
        %s305 = sand.u32 %s151, 1
        %s306 = smul.addr %s305, 4
        %s307 = scalar_lea.vmem [#allocation11], %s306
        %p309 = scmp.eq.s32.totalorder %s32, 0
        // Predicated region
        $region45: #{tpu_custom_call.1} parent=31 // pred_check
          %p310 = pneg %p309
        $region46: #{tpu_custom_call.1} parent=31 // pred_check_branch
          %312 = sbr.rel (%p310) target = $region48
        $region47: #{tpu_custom_call.1} parent=31 // pred_region
          %vm313 = vcmask 7168
          %314 = vst.msk [vmem:[#allocation2] sm:$0xff] %vm313, -inf
          %315 = vst.msk [vmem:[#allocation3] sm:$0xff] %vm313, 0.0
          %vm316 = vcmask 64512
          %317 = vst.msk [vmem:[#allocation4] sm:$0xff] %vm316, 0.0
        $region48: #{tpu_custom_call.1} parent=31 // pred_fallthru
          _
        %s318 = smul.u32 %s32, 8
        %s319 = smul.u32 %s31, 8
        %s320 = sadd.s32 %s319, 7
        %p321 = scmp.le.s32.totalorder %s318, %s320
        // Predicated region
        $region49: #{tpu_custom_call.1} parent=31 // pred_check
          %p322 = pneg %p321
        $region50: #{tpu_custom_call.1} parent=31 // pred_check_branch
          %324 = sbr.rel (%p322) target = $region52
        $region51: #{tpu_custom_call.1} parent=31 // pred_region
          %v325 = vld [vmem:[%s257] sm:$0xf]
          %v326 = vld [vmem:[%s266] sm:$0xf]
          %v327 = vld [vmem:[%s275] sm:$0xf]
          %vm328 = vcmask 64512
          %v330 = vsel %vm328, %v325, 0
          %v333 = vsel %vm328, %v326, 0
          %335 = vmatprep.subr.bf16.mxu0 0
          %336 = vmatpush1.bf16.xpose.msra.mxu0 0
          %337 = vmatprep.subr.bf16.mxu0 0
          %338 = vmatpush1.bf16.xpose.msra.mxu0 0
          %339 = vmatprep.subr.bf16.mxu0 0
          %340 = vmatpush1.bf16.xpose.msra.mxu0 0
          %341 = vmatprep.subr.bf16.mxu0 0
          %342 = vmatpush1.bf16.xpose.msra.mxu0 0
          %343 = vmatprep.subr.bf16.mxu0 0
          %344 = vmatpush1.bf16.xpose.msra.mxu0 0
          %345 = vmatprep.subr.bf16.mxu0 0
          %346 = vmatpush1.bf16.xpose.msra.mxu0 0
          %347 = vmatprep.subr.bf16.mxu0 0
          %348 = vmatpush1.bf16.xpose.msra.mxu0 0
          %349 = vmatprep.subr.bf16.mxu0 0
          %350 = vmatpush1.bf16.xpose.msra.mxu0 %v333
          %351 = vmatprep.subr.bf16.mxu0 0
          %352 = vmatpush2.bf16.xpose.msra.mxu0 0
          %353 = vmatprep.subr.bf16.mxu0 0
          %354 = vmatpush2.bf16.xpose.msra.mxu0 0
          %355 = vmatprep.subr.bf16.mxu0 0
          %356 = vmatpush2.bf16.xpose.msra.mxu0 0
          %357 = vmatprep.subr.bf16.mxu0 0
          %358 = vmatpush2.bf16.xpose.msra.mxu0 0
          %359 = vmatprep.subr.bf16.mxu0 0
          %360 = vmatpush2.bf16.xpose.msra.mxu0 0
          %361 = vmatprep.subr.bf16.mxu0 0
          %362 = vmatpush2.bf16.xpose.msra.mxu0 0
          %363 = vmatprep.subr.bf16.mxu0 0
          %364 = vmatpush2.bf16.xpose.msra.mxu0 0
          %365 = vmatprep.subr.bf16.mxu0 0
          %366 = vmatpush2.bf16.xpose.msra.mxu0 0
          %367 = vmatprep.mubr.bf16.mxu0 0
          %368 = vmatmul.mubr.bf16.gmra.mxu0 %v330
          %v369 = vpop.f32.mrf.mxu0
          %v370 = vadd.f32 0.0, %v369
          %v371 = vpop.f32.mrf.mxu0
          %v372 = vpop.f32.mrf.mxu0
          %v373 = vpop.f32.mrf.mxu0
          %374 = vdwg.mxu0
          %v375 = vlaneseq
          %v376 = vshrl.u32 %v375, 7
          %v377 = vstv %s319
          %v378 = vadd.s32 %v376, %v377
          %v379 = vlaneseq
          %v380 = vand.u32 %v379, 127
          %v381 = vstv %s318
          %v382 = vadd.s32 %v380, %v381
          %vm383 = vcmp.ge.s32.totalorder %v378, %v382
          %v384 = vsel %vm383, %v370, -1e+30
          %v385 = vld [vmem:[#allocation2] sm:$0xff]
          %v386 = vsel %vm328, %v384, -inf
          %387 = vmax.xlane.f32.xlu0 %v386
          %v388 = vpop.xlane.xlu0 %387
          %v389 = vmax.f32 %v385, %v388
          %v390 = vsub.f32 %v385, %v389
          %v391 = vmul.f32 %v390, 1.442695
          %v392 = vpow.pop %v391
          %394 = vset.pattern.permute.xlu0 0
          %395 = vperm.xlu0 %394, %v389
          %v396 = vpop.permute.xlu0 %395
          %v398 = vsub.f32 %v384, %v396
          %v399 = vmul.f32 %v398, 1.442695
          %v400 = vpow.pop %v399
          %v401 = vld [vmem:[#allocation3] sm:$0xff]
          %v402 = vmul.f32 %v392, %v401
          %v403 = vsel %vm328, %v400, 0.0
          %404 = vadd.xlane.f32.xlu0 %v403
          %v405 = vpop.xlane.xlu0 %404
          %v406 = vadd.f32 %v402, %v405
          %vm407 = vcmask 7168
          %408 = vst.msk [vmem:[#allocation3] sm:$0xff] %vm407, %v406
          %v409 = vld [vmem:[#allocation4] sm:$0xff]
          %411 = vset.pattern.permute.xlu0 0
          %412 = vperm.xlu0 %411, %v392
          %v413 = vpop.permute.xlu0 %412
          %v415 = vmul.f32 %v413, %v409
          %v416 = vpack.c.bf16 %v400, %v400
          %v418 = vsel %vm328, %v416, 0
          %vm420 = vcmask 1043456
          %v422 = vsel %vm420, %v327, 0
          %424 = vmatprep.subr.bf16.mxu0 0
          %425 = vmatpush1.bf16.msra.mxu0 0
          %426 = vmatprep.subr.bf16.mxu0 0
          %427 = vmatpush1.bf16.msra.mxu0 0
          %428 = vmatprep.subr.bf16.mxu0 0
          %429 = vmatpush1.bf16.msra.mxu0 0
          %430 = vmatprep.subr.bf16.mxu0 0
          %431 = vmatpush1.bf16.msra.mxu0 0
          %432 = vmatprep.subr.bf16.mxu0 0
          %433 = vmatpush1.bf16.msra.mxu0 0
          %434 = vmatprep.subr.bf16.mxu0 0
          %435 = vmatpush1.bf16.msra.mxu0 0
          %436 = vmatprep.subr.bf16.mxu0 0
          %437 = vmatpush1.bf16.msra.mxu0 0
          %438 = vmatprep.subr.bf16.mxu0 0
          %439 = vmatpush1.bf16.msra.mxu0 %v422
          %440 = vmatprep.subr.bf16.mxu0 0
          %441 = vmatpush2.bf16.msra.mxu0 0
          %442 = vmatprep.subr.bf16.mxu0 0
          %443 = vmatpush2.bf16.msra.mxu0 0
          %444 = vmatprep.subr.bf16.mxu0 0
          %445 = vmatpush2.bf16.msra.mxu0 0
          %446 = vmatprep.subr.bf16.mxu0 0
          %447 = vmatpush2.bf16.msra.mxu0 0
          %448 = vmatprep.subr.bf16.mxu0 0
          %449 = vmatpush2.bf16.msra.mxu0 0
          %450 = vmatprep.subr.bf16.mxu0 0
          %451 = vmatpush2.bf16.msra.mxu0 0
          %452 = vmatprep.subr.bf16.mxu0 0
          %453 = vmatpush2.bf16.msra.mxu0 0
          %454 = vmatprep.subr.bf16.mxu0 0
          %455 = vmatpush2.bf16.msra.mxu0 0
          %456 = vmatprep.mubr.bf16.mxu0 0
          %457 = vmatmul.mubr.bf16.gmra.mxu0 %v418
          %v458 = vpop.f32.mrf.mxu0
          %v459 = vadd.f32 0.0, %v458
          %v460 = vpop.f32.mrf.mxu0
          %v461 = vpop.f32.mrf.mxu0
          %v462 = vpop.f32.mrf.mxu0
          %463 = vdwg.mxu0
          %v464 = vadd.f32 %v415, %v459
          %465 = vst.msk [vmem:[#allocation4] sm:$0xff] %vm328, %v464
          %466 = vst.msk [vmem:[#allocation2] sm:$0xff] %vm407, %v389
        $region52: #{tpu_custom_call.1} parent=31 // pred_fallthru
          _
        // Predicated region
        $region53: #{tpu_custom_call.1} parent=31 // pred_check
          %p467 = pneg %p309
        $region54: #{tpu_custom_call.1} parent=31 // pred_check_branch
          %469 = sbr.rel (%p467) target = $region56
        $region55: #{tpu_custom_call.1} parent=31 // pred_region
          %v470 = vld [vmem:[#allocation3] sm:$0xff]
          %v471 = vrcp.pop %v470
          %v472 = vld [vmem:[#allocation4] sm:$0xff]
          %474 = vset.pattern.permute.xlu0 0
          %475 = vperm.xlu0 %474, %v471
          %v476 = vpop.permute.xlu0 %475
          %v478 = vmul.f32 %v472, %v476
          %v479 = vpack.c.bf16 %v478, %v478
          %vm480 = vcmask 60416
          %481 = vst.msk [vmem:[%s307] sm:$0xf] %vm480, %v479
        $region56: #{tpu_custom_call.1} parent=31 // pred_fallthru
          _
        %s482 = sand.u32 %s151, 1
        %s483 = scalar_lea.sflag [#allocation7], %s482
        %s484 = sand.u32 %s151, 1
        %s485 = smul.addr %s484, 4
        %s486 = scalar_lea.vmem [#allocation11], %s485
        // Predicated region
        $region57: #{tpu_custom_call.1} parent=31 // pred_check
          %p487 = pneg %p161
        $region58: #{tpu_custom_call.1} parent=31 // pred_check_branch
          %489 = sbr.rel (%p487) target = $region60
        $region59: #{tpu_custom_call.1} parent=31 // pred_region
          %s491 = ssub.s32 64, 64
          %492 = vsyncadd %s483, %s491
          %s493 = sadd.s32 %s31, %s30
          %s494 = smul.addr %s29, 4
          %s495 = sadd.s32 %s493, %s494
          %s496 = smul.addr %s495, 64
          %s497 = scalar_lea.hbm %s3, %s496
          %s499 = sshll.u32 %s486, 4
          %s500 = int_to_ptr.vmem [resolvable:$true] %s499
          %502 = dma.vmem_to_hbm [thread:$0]  %s500, 64, %s497, %s483
        $region60: #{tpu_custom_call.1} parent=31 // pred_fallthru
          _
      $region32: #{tpu_custom_call.1} parent=5 // pred_fallthru
        _
      %p503 = scmp.le.s32.totalorder 2, %s18
      // Predicated region
      $region61: #{tpu_custom_call.1} parent=5 // pred_check
        %p504 = pneg %p503
      $region62: #{tpu_custom_call.1} parent=5 // pred_check_branch
        %506 = sbr.rel (%p504) target = $region64
      $region63: #{tpu_custom_call.1} parent=5 // pred_region
        %s507 = ssub.s32 %s18, 2
        // Predicated region
        $region65: #{tpu_custom_call.1} parent=63 // pred_check
          %p508 = pneg %p167
        $region66: #{tpu_custom_call.1} parent=63 // pred_check_branch
          %510 = sbr.rel (%p508) target = $region68
        $region67: #{tpu_custom_call.1} parent=63 // pred_region
          %s511 = sand.u32 %s152, 1
          %s512 = scalar_lea.sflag [#allocation7], %s511
          %s513 = sand.u32 %s152, 1
          %s514 = smul.addr %s513, 4
          %s515 = scalar_lea.vmem [#allocation11], %s514
          %516 = dma.done %s512, 64
        $region68: #{tpu_custom_call.1} parent=63 // pred_fallthru
          _
      $region64: #{tpu_custom_call.1} parent=5 // pred_fallthru
        _
    $region6: #{tpu_custom_call.1} parent=1 // loop_footer
      %s22 = sadd.s32 1, %s18
    $region7: #{tpu_custom_call.1} parent=1 // loop_footer_branch
      %17 = sbr.rel target = $region3
    $region8: #{tpu_custom_call.1} parent=1 // loop_exit
      _
    %517 = vsyncpa [#allocation6], 1
    %s518 = scalar_lea.sflag [#allocation6], 1
    %519 = vsyncpa %s518, 1
    %520 = vsyncpa [#allocation9], 1
    %s521 = scalar_lea.sflag [#allocation9], 1
    %522 = vsyncpa %s521, 1
    %523 = vsyncpa [#allocation7], 1
    %s524 = scalar_lea.sflag [#allocation7], 1
    %525 = vsyncpa %s524, 1

</llo_original>
